<compile_context>
chip_gen: v7x
topology: tpu7x:2x2x1
jax: 0.10.0
libtpu: 0.0.40
codegen_flags: <defaults>
</compile_context>

<pallas_src>
import math
import functools

import jax
import jax.numpy as jnp
from jax.experimental import pallas as pl
from jax.experimental.pallas import tpu as pltpu


# ---------------------------------------------------------------------------
# Kernels
# ---------------------------------------------------------------------------

def _g0_kernel(x_ref, mu_ref, g0_ref, *, sigma, dim):
    # x_ref : [dim, tT, tS]   (time, sample) -> (sublane, lane)
    # mu_ref: [1, tT, dim]    mu block for gaussian `g`
    # g0_ref: [1, tT, tS]
    inv_sig2 = 1.0 / (sigma * sigma)
    coef = (1.0 / (sigma * math.sqrt(2.0 * math.pi))) ** dim

    mu_t = mu_ref[0]                                 # [tT, dim]
    z = jnp.zeros(x_ref.shape[1:], jnp.float32)      # [tT, tS]
    for d in range(dim):
        diff = x_ref[d] - mu_t[:, d:d + 1]           # lane-broadcast of mu -> [tT, tS]
        z = z + diff * diff
    g0_ref[0] = coef * jnp.exp((-0.5 * inv_sig2) * z)


def _deriv_kernel(x_ref, mu_ref, g0_ref, out_ref, *, sigma, dim, order):
    # x_ref  : [dim, tT, tS]
    # mu_ref : [1, tT, dim]
    # g0_ref : [1, tT, tS]    cached zeroth-order values (input)
    # out_ref: [1, dim, tT, tS]
    inv_sig2 = 1.0 / (sigma * sigma)
    g0 = g0_ref[0]
    mu_t = mu_ref[0]
    for d in range(dim):
        # diff recomputed per write (one cheap VPU sub) instead of kept live.
        diff = x_ref[d] - mu_t[:, d:d + 1]
        w = -diff * inv_sig2                         # -(x - mu) / sigma^2
        if order == 1:
            out_ref[0, d] = w * g0
        else:  # order == 2
            out_ref[0, d] = (w * w - inv_sig2) * g0


def _fused_kernel(x_ref, mu_ref, g0_ref, out_ref, *, sigma, dim, order):
    # First-call fast path: compute g0 AND the requested derivative in one
    # pass over x (g0 never round-trips through HBM between the two).
    # x_ref  : [dim, tT, tS]
    # mu_ref : [1, tT, dim]
    # g0_ref : [1, tT, tS]        (output)
    # out_ref: [1, dim, tT, tS]   (output)
    inv_sig2 = 1.0 / (sigma * sigma)
    coef = (1.0 / (sigma * math.sqrt(2.0 * math.pi))) ** dim

    mu_t = mu_ref[0]
    z = jnp.zeros(x_ref.shape[1:], jnp.float32)
    for d in range(dim):
        diff = x_ref[d] - mu_t[:, d:d + 1]
        z = z + diff * diff
    g0 = coef * jnp.exp((-0.5 * inv_sig2) * z)
    g0_ref[0] = g0
    for d in range(dim):
        diff = x_ref[d] - mu_t[:, d:d + 1]
        w = -diff * inv_sig2
        if order == 1:
            out_ref[0, d] = w * g0
        else:  # order == 2
            out_ref[0, d] = (w * w - inv_sig2) * g0


# ---------------------------------------------------------------------------
# Wrappers
# ---------------------------------------------------------------------------

_VMEM_LIMIT = 32 * 1024 * 1024        # safe on v5e/v6e/v7x
_VMEM_BUDGET = 24 * 1024 * 1024       # keep double-buffered tiles well under limit


def _round_up(v, m):
    return -(-v // m) * m


def _choose_tiles(T, S, tiles_per_step):
    """Pick lane-dense (tT, tS): tT % 8 == 0, tS % 128 == 0, under VMEM budget."""
    tS = min(_round_up(S, 128), 512)
    tT = min(_round_up(T, 8), 256)

    def usage(tt, ts):
        # double-buffered f32 [tt, ts] tiles per grid step + small mu block
        return 2 * tiles_per_step * tt * ts * 4 + 2 * tt * 128 * 4

    while usage(tT, tS) > _VMEM_BUDGET and tT > 8:
        tT = max(8, tT // 2)
    while usage(tT, tS) > _VMEM_BUDGET and tS > 128:
        tS = max(128, tS // 2)
    return tT, tS


def _pad_inputs(x, mu, tT, tS):
    # x: [T, S, D] -> x_k: [D, Tp, Sp] ; mu: [G, T, D] -> [G, Tp, D]
    T, S, D = x.shape
    Tp = _round_up(T, tT)
    Sp = _round_up(S, tS)
    x_k = jnp.transpose(x, (2, 0, 1))
    if Tp != T or Sp != S:
        x_k = jnp.pad(x_k, ((0, 0), (0, Tp - T), (0, Sp - S)))
    mu_k = mu
    if Tp != T:
        mu_k = jnp.pad(mu, ((0, 0), (0, Tp - T), (0, 0)))
    return x_k, mu_k, Tp, Sp


def _compiler_params():
    return pltpu.CompilerParams(
        dimension_semantics=("parallel", "parallel", "parallel"),
        vmem_limit_bytes=_VMEM_LIMIT,
    )


def gaussian_g0(x, mu, sigma):
    """x: [T, S, D], mu: [G, T, D], sigma: python float -> g0: [G, T, S]."""
    x = jnp.asarray(x, jnp.float32)
    mu = jnp.asarray(mu, jnp.float32)
    T, S, D = x.shape
    G = mu.shape[0]
    assert mu.shape == (G, T, D)

    tT, tS = _choose_tiles(T, S, tiles_per_step=D + 1)
    x_k, mu_k, Tp, Sp = _pad_inputs(x, mu, tT, tS)

    kernel = functools.partial(_g0_kernel, sigma=float(sigma), dim=D)
    g0 = pl.pallas_call(
        kernel,
        out_shape=jax.ShapeDtypeStruct((G, Tp, Sp), jnp.float32),
        # G innermost: the x block index is constant across g -> no re-fetch of x.
        grid=(Tp // tT, Sp // tS, G),
        in_specs=[
            pl.BlockSpec((D, tT, tS), lambda it, js, g: (0, it, js)),
            pl.BlockSpec((1, tT, D), lambda it, js, g: (g, it, 0)),
        ],
        out_specs=pl.BlockSpec((1, tT, tS), lambda it, js, g: (g, it, js)),
        compiler_params=_compiler_params(),
    )(x_k, mu_k)

    if Tp != T or Sp != S:
        g0 = g0[:, :T, :S]
    return g0


def gaussian_deriv(x, mu, sigma, g0, order, torch_layout=True):
    """Order-1 or order-2 gaussian factor derivatives from a cached g0.

    The kernel writes the lane-dense [G, D, T, S] layout. With
    torch_layout=True the result is relaid out (+ padding cropped) to the
    PyTorch [gauss, time, sample, dim] convention."""
    assert order in (1, 2)
    x = jnp.asarray(x, jnp.float32)
    mu = jnp.asarray(mu, jnp.float32)
    g0 = jnp.asarray(g0, jnp.float32)
    T, S, D = x.shape
    G = mu.shape[0]
    assert mu.shape == (G, T, D) and g0.shape == (G, T, S)

    tT, tS = _choose_tiles(T, S, tiles_per_step=2 * D + 1)
    x_k, mu_k, Tp, Sp = _pad_inputs(x, mu, tT, tS)
    g0_k = g0
    if Tp != T or Sp != S:
        g0_k = jnp.pad(g0, ((0, 0), (0, Tp - T), (0, Sp - S)))

    kernel = functools.partial(_deriv_kernel, sigma=float(sigma), dim=D, order=order)
    out = pl.pallas_call(
        kernel,
        out_shape=jax.ShapeDtypeStruct((G, D, Tp, Sp), jnp.float32),
        grid=(Tp // tT, Sp // tS, G),
        in_specs=[
            pl.BlockSpec((D, tT, tS), lambda it, js, g: (0, it, js)),
            pl.BlockSpec((1, tT, D), lambda it, js, g: (g, it, 0)),
            pl.BlockSpec((1, tT, tS), lambda it, js, g: (g, it, js)),
        ],
        out_specs=pl.BlockSpec((1, D, tT, tS), lambda it, js, g: (g, 0, it, js)),
        compiler_params=_compiler_params(),
    )(x_k, mu_k, g0_k)

    if torch_layout:
        out = jnp.transpose(out[:, :, :T, :S], (0, 2, 3, 1))
    elif Tp != T or Sp != S:
        out = out[:, :, :T, :S]
    return out


def gaussian_g0_and_deriv(x, mu, sigma, order, torch_layout=True):
    """Fused first-call path: g0 and the order-{1,2} derivative in one pass."""
    assert order in (1, 2)
    x = jnp.asarray(x, jnp.float32)
    mu = jnp.asarray(mu, jnp.float32)
    T, S, D = x.shape
    G = mu.shape[0]
    assert mu.shape == (G, T, D)

    tT, tS = _choose_tiles(T, S, tiles_per_step=2 * D + 1)
    x_k, mu_k, Tp, Sp = _pad_inputs(x, mu, tT, tS)

    kernel = functools.partial(_fused_kernel, sigma=float(sigma), dim=D, order=order)
    g0, out = pl.pallas_call(
        kernel,
        out_shape=(jax.ShapeDtypeStruct((G, Tp, Sp), jnp.float32),
                   jax.ShapeDtypeStruct((G, D, Tp, Sp), jnp.float32)),
        grid=(Tp // tT, Sp // tS, G),
        in_specs=[
            pl.BlockSpec((D, tT, tS), lambda it, js, g: (0, it, js)),
            pl.BlockSpec((1, tT, D), lambda it, js, g: (g, it, 0)),
        ],
        out_specs=[
            pl.BlockSpec((1, tT, tS), lambda it, js, g: (g, it, js)),
            pl.BlockSpec((1, D, tT, tS), lambda it, js, g: (g, 0, it, js)),
        ],
        compiler_params=_compiler_params(),
    )(x_k, mu_k)

    if Tp != T or Sp != S:
        g0 = g0[:, :T, :S]
    if torch_layout:
        out = jnp.transpose(out[:, :, :T, :S], (0, 2, 3, 1))
    elif Tp != T or Sp != S:
        out = out[:, :, :T, :S]
    return g0, out


class Gaussian:
    """JAX/Pallas port of the PyTorch Gaussian module (forward pass only).

    Matches the PyTorch caching behavior: g0 is computed from the first x seen
    and cached; derivative factors are recomputed every call from the passed-in
    x and the cached g0."""

    def __init__(self, mu, sigma):
        self.mu = jnp.asarray(mu, jnp.float32)          # [gauss, time, dim]
        self.sigma = float(sigma)
        self.gauss_num, self.time, self.dim = self.mu.shape
        self.g0 = None

    def forward(self, x, diff_order=0):
        x = jnp.asarray(x, jnp.float32)
        if diff_order == 0:
            if self.g0 is None:
                self.g0 = gaussian_g0(x, self.mu, self.sigma)
            return self.g0
        elif diff_order in (1, 2):
            if self.g0 is None:
                # Fused first-call path: one pass over x computes g0 + deriv.
                self.g0, out = gaussian_g0_and_deriv(
                    x, self.mu, self.sigma, order=diff_order)
                return out
            return gaussian_deriv(x, self.mu, self.sigma, self.g0, order=diff_order)
        else:
            raise RuntimeError(
                "higher order derivatives of the gaussian has not bee implemented!")

    __call__ = forward


# ---------------------------------------------------------------------------
# Reference + self-test
# ---------------------------------------------------------------------------

def _reference(x, mu, sigma):
    coef = 1.0 / (sigma * jnp.sqrt(2.0 * jnp.pi))
    diff = x[None, :, :, :] - mu[:, :, None, :]          # [G, T, S, D]
    g0 = jnp.prod(coef * jnp.exp(-0.5 * diff ** 2 / sigma ** 2), axis=-1)
    g1 = -diff / sigma ** 2 * g0[..., None]
    g2 = (-1.0 / sigma ** 2 + (diff / sigma ** 2) ** 2) * g0[..., None]
    return g0, g1, g2


if __name__ == "__main__":
    key = jax.random.PRNGKey(0)
    k_mu, k_x = jax.random.split(key)

    GAUSS, T, S, D = 4, 8, 16, 2
    sigma = 0.8

    mu = jax.random.normal(k_mu, (GAUSS, T, D), dtype=jnp.float32)
    x = jax.random.normal(k_x, (T, S, D), dtype=jnp.float32)

    r0, r1, r2 = _reference(x, mu, sigma)

    # Standard path: diff_order=0 first (caches g0), then derivatives.
    model = Gaussian(mu, sigma)
    g0 = jax.block_until_ready(model.forward(x, diff_order=0))
    g1 = jax.block_until_ready(model.forward(x, diff_order=1))
    g2 = jax.block_until_ready(model.forward(x, diff_order=2))

    assert g0.shape == (GAUSS, T, S)
    assert g1.shape == (GAUSS, T, S, D)
    assert g2.shape == (GAUSS, T, S, D)
    assert jnp.allclose(g0, r0, atol=1e-5, rtol=1e-5)
    assert jnp.allclose(g1, r1, atol=1e-5, rtol=1e-5)
    assert jnp.allclose(g2, r2, atol=1e-5, rtol=1e-5)

    # Fused first-call path: derivative requested before g0 was ever cached.
    model2 = Gaussian(mu, sigma)
    g1_first = jax.block_until_ready(model2.forward(x, diff_order=1))
    assert jnp.allclose(g1_first, r1, atol=1e-5, rtol=1e-5)
    assert jnp.allclose(model2.g0, r0, atol=1e-5, rtol=1e-5)

    print("KERNEL_OK")
</pallas_src>

<mosaic_0001>
module attributes {stable_mosaic.version = 11 : i64} {
  func.func @_g0_kernel(%arg0: i32, %arg1: i32, %arg2: i32, %arg3: memref<2x8x128xf32, #tpu.memory_space<vmem>>, %arg4: memref<1x8x2xf32, #tpu.memory_space<vmem>>, %arg5: memref<1x8x128xf32, #tpu.memory_space<vmem>>) attributes {dimension_semantics = [#tpu.dimension_semantics<parallel>, #tpu.dimension_semantics<parallel>, #tpu.dimension_semantics<parallel>], iteration_bounds = array<i64: 1, 1, 4>, scalar_prefetch = 0 : i64, scratch_operands = 0 : i64, tpu.core_type = #tpu.core_type<tc>, window_params = [{transform_indices = @transform_0, window_bounds = array<i64: 2, 8, 128>}, {transform_indices = @transform_1, window_bounds = array<i64: 1, 8, 2>}, {transform_indices = @transform_2, window_bounds = array<i64: 1, 8, 128>}]} {
    %c0 = arith.constant 0 : index
    %c0_0 = arith.constant 0 : index
    %c0_1 = arith.constant 0 : index
    %0 = vector.load %arg4[%c0, %c0_0, %c0_1] : memref<1x8x2xf32, #tpu.memory_space<vmem>>, vector<1x8x2xf32>
    %1 = vector.shape_cast %0 : vector<1x8x2xf32> to vector<8x2xf32>
    %cst = arith.constant 0.000000e+00 : f32
    %2 = vector.broadcast %cst : f32 to vector<8x128xf32>
    %c0_2 = arith.constant 0 : index
    %c0_3 = arith.constant 0 : index
    %c0_4 = arith.constant 0 : index
    %3 = vector.load %arg3[%c0_2, %c0_3, %c0_4] : memref<2x8x128xf32, #tpu.memory_space<vmem>>, vector<1x8x128xf32>
    %4 = vector.shape_cast %3 : vector<1x8x128xf32> to vector<8x128xf32>
    %5 = vector.extract_strided_slice %1 {offsets = [0, 0], sizes = [8, 1], strides = [1, 1]} : vector<8x2xf32> to vector<8x1xf32>
    %6 = vector.broadcast %5 : vector<8x1xf32> to vector<8x128xf32>
    %7 = arith.subf %4, %6 : vector<8x128xf32>
    %8 = arith.mulf %7, %7 : vector<8x128xf32>
    %9 = arith.addf %2, %8 : vector<8x128xf32>
    %c1 = arith.constant 1 : index
    %c0_5 = arith.constant 0 : index
    %c0_6 = arith.constant 0 : index
    %10 = vector.load %arg3[%c1, %c0_5, %c0_6] : memref<2x8x128xf32, #tpu.memory_space<vmem>>, vector<1x8x128xf32>
    %11 = vector.shape_cast %10 : vector<1x8x128xf32> to vector<8x128xf32>
    %12 = vector.extract_strided_slice %1 {offsets = [0, 1], sizes = [8, 1], strides = [1, 1]} : vector<8x2xf32> to vector<8x1xf32>
    %13 = vector.broadcast %12 : vector<8x1xf32> to vector<8x128xf32>
    %14 = arith.subf %11, %13 : vector<8x128xf32>
    %15 = arith.mulf %14, %14 : vector<8x128xf32>
    %16 = arith.addf %9, %15 : vector<8x128xf32>
    %cst_7 = arith.constant -7.812500e-01 : f32
    %17 = vector.broadcast %cst_7 : f32 to vector<8x128xf32>
    %18 = arith.mulf %17, %16 : vector<8x128xf32>
    %19 = math.exp %18 : vector<8x128xf32>
    %cst_8 = arith.constant 0.248679593 : f32
    %20 = vector.broadcast %cst_8 : f32 to vector<8x128xf32>
    %21 = arith.mulf %20, %19 : vector<8x128xf32>
    %c0_9 = arith.constant 0 : index
    %c0_10 = arith.constant 0 : index
    %c0_11 = arith.constant 0 : index
    %22 = vector.load %arg5[%c0_9, %c0_10, %c0_11] : memref<1x8x128xf32, #tpu.memory_space<vmem>>, vector<1x8x128xf32>
    %23 = vector.shape_cast %22 : vector<1x8x128xf32> to vector<8x128xf32>
    %24 = vector.shape_cast %21 : vector<8x128xf32> to vector<1x8x128xf32>
    tpu.vector_store %arg5[%c0_9, %c0_10, %c0_11], %24 {strides = array<i32>} : memref<1x8x128xf32, #tpu.memory_space<vmem>>, vector<1x8x128xf32>,
    return
  }
  func.func @transform_0(%arg0: i32, %arg1: i32, %arg2: i32) -> (i32, i32, i32) {
    %c0_i32 = arith.constant 0 : i32
    %c0_i32_0 = arith.constant 0 : i32
    return %c0_i32, %arg0, %arg1 : i32, i32, i32
  }
  func.func @transform_1(%arg0: i32, %arg1: i32, %arg2: i32) -> (i32, i32, i32) {
    %c0_i32 = arith.constant 0 : i32
    %c0_i32_0 = arith.constant 0 : i32
    return %arg2, %arg0, %c0_i32 : i32, i32, i32
  }
  func.func @transform_2(%arg0: i32, %arg1: i32, %arg2: i32) -> (i32, i32, i32) {
    %c0_i32 = arith.constant 0 : i32
    return %arg2, %arg0, %arg1 : i32, i32, i32
  }
}

</mosaic_0001>

<llo_original>
// kernel: tpu_custom_call.1
$region0: #{tpu_custom_call.1}
  #allocation0 [shape = 'u32[]', space=smem, size = 0x4, offset = 0x4, fixed_abs, tag = 'smem constant byte address 0x4 - core index']
  #allocation1 [shape = 'u32[144,128]{1,0:T(1,128)}', space=vmem, size = 0x12000, scoped, tag = 'internal scratch']
  %s0 = inlined_call_operand.vmem [shape: f32[2,8,128], index: 0, kind: input, shape index: {}]
  %s1 = inlined_call_operand.vmem [shape: f32[4,8,2], index: 1, kind: input, shape index: {}]
  %s2 = inlined_call_operand.hbm [shape: f32[4,8,128], index: 2, kind: output, shape index: {}]
  %s3 = sld [smem:[#allocation0]]
  $region41: #{tpu_custom_call.1} parent=0
    _
  %s5 = ssub.s32 1, %s3
  %s6 = scalar_select 0, %s5, %s3
  $region1: #{tpu_custom_call.1} parent=0
    #allocation2 [shape = 'u8[8192]{0}', space=vmem, size = 0x2000, scoped, tag = 'output window, operand 0']
    #allocation3 [shape = 's32[2]{0}', space=sflag, size = 0x8, scoped, tag = 'scoped memory for tpu_custom_call.1']
    %7 = vsyncpa [#allocation3], 0
    %s8 = scalar_lea.sflag [#allocation3], 1
    %9 = vsyncpa %s8, 0
    loop: start=0, step=1, limit=6
    $region2: #{tpu_custom_call.1} parent=1 // loop_pre_header
      _
    $region3: #{tpu_custom_call.1} parent=1 // loop_header
      %s11 = sphi 0, %s15
      %p12 = scmp.ge.s32.totalorder %s11, 6
      %s18 = sphi 0, %s37
      %s19 = sphi 0, %s33
      %s20 = sphi 0, %s29
      %s21 = sphi 0, %s18
      %s22 = sphi 0, %s19
      %s23 = sphi 0, %s20
      %s24 = sphi 0, %s21
      %s25 = sphi 0, %s22
      %s26 = sphi 0, %s23
      %s42 = sphi 0, %s44
      %s45 = sphi 0, %s42
      %s46 = sphi 0, %s45
      %s62 = sphi 0, %s46
      %s70 = sphi 0, %s72
      %s73 = sphi 0, %s70
      %s74 = sphi 0, %s73
      %s90 = sphi 0, %s74
      %s100 = sphi 0, %s102
      %s103 = sphi 0, %s100
      %s104 = sphi 0, %s103
      %s120 = sphi 0, %s104
    $region4: #{tpu_custom_call.1} parent=1 // loop_header_branch
      %14 = sbr.rel (%p12) target = $region8
    $region5: #{tpu_custom_call.1} parent=1 // loop_body
      %s16 = ssub.s32 %s11, 1
      %s17 = ssub.s32 %s11, 2
      %s27 = sadd.s32 1, %s20
      %p28 = scmp.ge.s32.totalorder %s27, 4
      %s29 = scalar_select %p28, 0, %s27
      %s30 = sadd.s32 1, %s19
      %s31 = scalar_select %p28, %s30, %s19
      %p32 = scmp.ge.s32.totalorder %s31, 1
      %s33 = scalar_select %p32, 0, %s31
      %s34 = sadd.s32 1, %s18
      %s35 = scalar_select %p32, %s34, %s18
      %p36 = scmp.ge.s32.totalorder %s35, 1
      %s37 = scalar_select %p36, 0, %s35
      %s38 = ssub.s32 %s18, %s37
      %s39 = ssub.s32 %s19, %s33
      %s40 = sor.u32 %s38, %s39
      %p41 = scmp.eq.s32.totalorder %s40, 0
      %s43 = sadd.s32 %s42, 1
      %s44 = scalar_select %p41, %s42, %s43
      %p47 = pneg %p41
      %p48 = scmp.eq.s32.totalorder %s11, 3
      %p49 = por %p47, %p48
      %p50 = scmp.ne.s32.totalorder %s42, %s45
      %p51 = scmp.eq.s32.totalorder %s11, 0
      %p52 = por %p50, %p51
      %p53 = scmp.ne.s32.totalorder %s42, %s45
      %p54 = scmp.eq.s32.totalorder %s16, 3
      %p55 = por %p53, %p54
      %p56 = scmp.ne.s32.totalorder %s45, %s46
      %p57 = scmp.eq.s32.totalorder %s16, 0
      %p58 = por %p56, %p57
      %p59 = scmp.ne.s32.totalorder %s45, %s46
      %p60 = scmp.eq.s32.totalorder %s17, 3
      %p61 = por %p59, %p60
      %p63 = scmp.ne.s32.totalorder %s46, %s62
      %p64 = scmp.eq.s32.totalorder %s17, 0
      %p65 = por %p63, %p64
      %s66 = ssub.s32 %s20, %s29
      %s67 = ssub.s32 %s18, %s37
      %s68 = sor.u32 %s66, %s67
      %p69 = scmp.eq.s32.totalorder %s68, 0
      %s71 = sadd.s32 %s70, 1
      %s72 = scalar_select %p69, %s70, %s71
      %p75 = pneg %p69
      %p76 = scmp.eq.s32.totalorder %s11, 3
      %p77 = por %p75, %p76
      %p78 = scmp.ne.s32.totalorder %s70, %s73
      %p79 = scmp.eq.s32.totalorder %s11, 0
      %p80 = por %p78, %p79
      %p81 = scmp.ne.s32.totalorder %s70, %s73
      %p82 = scmp.eq.s32.totalorder %s16, 3
      %p83 = por %p81, %p82
      %p84 = scmp.ne.s32.totalorder %s73, %s74
      %p85 = scmp.eq.s32.totalorder %s16, 0
      %p86 = por %p84, %p85
      %p87 = scmp.ne.s32.totalorder %s73, %s74
      %p88 = scmp.eq.s32.totalorder %s17, 3
      %p89 = por %p87, %p88
      %p91 = scmp.ne.s32.totalorder %s74, %s90
      %p92 = scmp.eq.s32.totalorder %s17, 0
      %p93 = por %p91, %p92
      %s94 = ssub.s32 %s20, %s29
      %s95 = ssub.s32 %s18, %s37
      %s96 = sor.u32 %s94, %s95
      %s97 = ssub.s32 %s19, %s33
      %s98 = sor.u32 %s96, %s97
      %p99 = scmp.eq.s32.totalorder %s98, 0
      %s101 = sadd.s32 %s100, 1
      %s102 = scalar_select %p99, %s100, %s101
      %p105 = pneg %p99
      %p106 = scmp.eq.s32.totalorder %s11, 3
      %p107 = por %p105, %p106
      %p108 = scmp.ne.s32.totalorder %s100, %s103
      %p109 = scmp.eq.s32.totalorder %s11, 0
      %p110 = por %p108, %p109
      %p111 = scmp.ne.s32.totalorder %s100, %s103
      %p112 = scmp.eq.s32.totalorder %s16, 3
      %p113 = por %p111, %p112
      %p114 = scmp.ne.s32.totalorder %s103, %s104
      %p115 = scmp.eq.s32.totalorder %s16, 0
      %p116 = por %p114, %p115
      %p117 = scmp.ne.s32.totalorder %s103, %s104
      %p118 = scmp.eq.s32.totalorder %s17, 3
      %p119 = por %p117, %p118
      %p121 = scmp.ne.s32.totalorder %s104, %s120
      %p122 = scmp.eq.s32.totalorder %s17, 0
      %p123 = por %p121, %p122
      %p124 = scmp.le.s32.totalorder 1, %s11
      %p125 = scmp.lt.s32.totalorder %s11, 5
      %p126 = pnand %p124, %p125
      %p127 = pneg %p126
      // Predicated region
      $region9: #{tpu_custom_call.1} parent=5 // pred_check
        _
      $region10: #{tpu_custom_call.1} parent=5 // pred_check_branch
        %129 = sbr.rel (%p126) target = $region12
      $region11: #{tpu_custom_call.1} parent=5 // pred_region
        %s130 = ssub.s32 %s11, 1
        // Predicated region
        $region13: #{tpu_custom_call.1} parent=11 // pred_check
          %p131 = pneg %p58
        $region14: #{tpu_custom_call.1} parent=11 // pred_check_branch
          %133 = sbr.rel (%p131) target = $region16
        $region15: #{tpu_custom_call.1} parent=11 // pred_region
          %p134 = scmp.lt.s32.totalorder %s21, 0
          %s135 = scalar_select %p134, %s21, 0
          %p136 = scmp.lt.s32.totalorder %s22, 0
          %s137 = scalar_select %p136, %s22, 0
          %s138 = sadd.s32 %s137, %s135
          %s139 = smul.addr %s138, 8
          %s140 = scalar_lea.vmem %s0, %s139
        $region16: #{tpu_custom_call.1} parent=11 // pred_fallthru
          _
      $region12: #{tpu_custom_call.1} parent=5 // pred_fallthru
        _
      %p141 = scmp.lt.s32.totalorder %s11, 4
      // Predicated region
      $region17: #{tpu_custom_call.1} parent=5 // pred_check
        %p142 = pneg %p141
      $region18: #{tpu_custom_call.1} parent=5 // pred_check_branch
        %144 = sbr.rel (%p142) target = $region20
      $region19: #{tpu_custom_call.1} parent=5 // pred_region
        // Predicated region
        $region21: #{tpu_custom_call.1} parent=19 // pred_check
          %p145 = pneg %p80
        $region22: #{tpu_custom_call.1} parent=19 // pred_check_branch
          %147 = sbr.rel (%p145) target = $region24
        $region23: #{tpu_custom_call.1} parent=19 // pred_region
          %p148 = scmp.lt.s32.totalorder %s20, 3
          %s149 = scalar_select %p148, %s20, 3
          %p150 = scmp.lt.s32.totalorder %s18, 0
          %s151 = scalar_select %p150, %s18, 0
          %s152 = sadd.s32 %s151, %s149
          %s153 = smul.addr %s152, 8
          %s154 = scalar_lea.vmem %s1, %s153
        $region24: #{tpu_custom_call.1} parent=19 // pred_fallthru
          _
      $region20: #{tpu_custom_call.1} parent=5 // pred_fallthru
        _
      %p155 = scmp.le.s32.totalorder 1, %s11
      %p156 = scmp.lt.s32.totalorder %s11, 5
      %p157 = pnand %p155, %p156
      %p158 = pneg %p157
      // Predicated region
      $region25: #{tpu_custom_call.1} parent=5 // pred_check
        _
      $region26: #{tpu_custom_call.1} parent=5 // pred_check_branch
        %160 = sbr.rel (%p157) target = $region28
      $region27: #{tpu_custom_call.1} parent=5 // pred_region
        %s161 = ssub.s32 %s11, 1
        %p162 = scmp.lt.s32.totalorder %s21, 0
        %s163 = scalar_select %p162, %s21, 0
        %p164 = scmp.lt.s32.totalorder %s22, 0
        %s165 = scalar_select %p164, %s22, 0
        %s166 = sadd.s32 %s165, %s163
        %s167 = smul.addr %s166, 8
        %s168 = scalar_lea.vmem %s0, %s167
        %p169 = pneg %p58
        %p170 = pneg %p55
        %p171 = scmp.lt.s32.totalorder %s23, 3
        %s172 = scalar_select %p171, %s23, 3
        %p173 = scmp.lt.s32.totalorder %s21, 0
        %s174 = scalar_select %p173, %s21, 0
        %s175 = sadd.s32 %s174, %s172
        %s176 = smul.addr %s175, 8
        %s177 = scalar_lea.vmem %s1, %s176
        %p178 = pneg %p86
        %p179 = pneg %p83
        %p180 = pneg %p116
        %p181 = pneg %p113
        %s182 = sand.u32 %s103, 1
        %s183 = scalar_lea.sflag [#allocation3], %s182
        %s184 = sand.u32 %s103, 1
        %s185 = smul.addr %s184, 8
        %s186 = scalar_lea.vmem [#allocation2], %s185
        %p187 = scmp.lt.s32.totalorder %s21, 0
        %s188 = scalar_select %p187, %s21, 0
        %p189 = scmp.lt.s32.totalorder %s22, 0
        %s190 = scalar_select %p189, %s22, 0
        %s191 = sadd.s32 %s190, %s188
        %s192 = smul.addr %s191, 8
        %s193 = scalar_lea.vmem %s0, %s192
        %p194 = scmp.lt.s32.totalorder %s23, 3
        %s195 = scalar_select %p194, %s23, 3
        %p196 = scmp.lt.s32.totalorder %s21, 0
        %s197 = scalar_select %p196, %s21, 0
        %s198 = sadd.s32 %s197, %s195
        %s199 = smul.addr %s198, 8
        %s200 = scalar_lea.vmem %s1, %s199
        %v201 = vld [vmem:[%s200] sm:$0xff]
        %v202 = vld [vmem:[%s193] sm:$0xff]
        %204 = vset.pattern.permute.xlu0 0
        %205 = vperm.xlu0 %204, %v201
        %v206 = vpop.permute.xlu0 %205
        %v208 = vsub.f32 %v202, %v206
        %v209 = vmul.f32 %v208, %v208
        %v210 = vadd.f32 %v209, 0.0
        %s211 = scalar_lea.vmem %s193, 8
        %v212 = vld [vmem:[%s211] sm:$0xff]
        %213 = vset.pattern.permute.xlu0 1
        %214 = vperm.xlu0 %213, %v201
        %v215 = vpop.permute.xlu0 %214
        %v217 = vsub.f32 %v212, %v215
        %v218 = vmul.f32 %v217, %v217
        %v219 = vadd.f32 %v210, %v218
        %v220 = vmul.f32 %v219, -0.78125
        %v221 = vmul.f32 %v220, 1.442695
        %v222 = vpow.pop %v221
        %v223 = vmul.f32 %v222, 0.2486796
        %224 = vst [vmem:[%s186] sm:$0xff] %v223
        %s225 = sand.u32 %s103, 1
        %s226 = scalar_lea.sflag [#allocation3], %s225
        %s227 = sand.u32 %s103, 1
        %s228 = smul.addr %s227, 8
        %s229 = scalar_lea.vmem [#allocation2], %s228
        // Predicated region
        $region29: #{tpu_custom_call.1} parent=27 // pred_check
          %p230 = pneg %p113
        $region30: #{tpu_custom_call.1} parent=27 // pred_check_branch
          %232 = sbr.rel (%p230) target = $region32
        $region31: #{tpu_custom_call.1} parent=27 // pred_region
          %s234 = ssub.s32 128, 128
          %235 = vsyncadd %s226, %s234
          %s236 = sadd.s32 %s22, %s21
          %s237 = sadd.s32 %s236, %s23
          %s238 = smul.addr %s237, 128
          %s239 = scalar_lea.hbm %s2, %s238
          %s241 = sshll.u32 %s229, 4
          %s242 = int_to_ptr.vmem [resolvable:$true] %s241
          %244 = dma.vmem_to_hbm [thread:$0]  %s242, 128, %s239, %s226
        $region32: #{tpu_custom_call.1} parent=27 // pred_fallthru
          _
      $region28: #{tpu_custom_call.1} parent=5 // pred_fallthru
        _
      %p245 = scmp.le.s32.totalorder 2, %s11
      // Predicated region
      $region33: #{tpu_custom_call.1} parent=5 // pred_check
        %p246 = pneg %p245
      $region34: #{tpu_custom_call.1} parent=5 // pred_check_branch
        %248 = sbr.rel (%p246) target = $region36
      $region35: #{tpu_custom_call.1} parent=5 // pred_region
        %s249 = ssub.s32 %s11, 2
        // Predicated region
        $region37: #{tpu_custom_call.1} parent=35 // pred_check
          %p250 = pneg %p119
        $region38: #{tpu_custom_call.1} parent=35 // pred_check_branch
          %252 = sbr.rel (%p250) target = $region40
        $region39: #{tpu_custom_call.1} parent=35 // pred_region
          %s253 = sand.u32 %s104, 1
          %s254 = scalar_lea.sflag [#allocation3], %s253
          %s255 = sand.u32 %s104, 1
          %s256 = smul.addr %s255, 8
          %s257 = scalar_lea.vmem [#allocation2], %s256
          %258 = dma.done %s254, 128
        $region40: #{tpu_custom_call.1} parent=35 // pred_fallthru
          _
      $region36: #{tpu_custom_call.1} parent=5 // pred_fallthru
        _
    $region6: #{tpu_custom_call.1} parent=1 // loop_footer
      %s15 = sadd.s32 1, %s11
    $region7: #{tpu_custom_call.1} parent=1 // loop_footer_branch
      %10 = sbr.rel target = $region3
    $region8: #{tpu_custom_call.1} parent=1 // loop_exit
      _
    %259 = vsyncpa [#allocation3], 1
    %s260 = scalar_lea.sflag [#allocation3], 1
    %261 = vsyncpa %s260, 1

</llo_original>
